<compile_context>
chip_gen: v6e
topology: v6e:2x2x1
jax: 0.10.0
libtpu: 0.0.40
codegen_flags: <defaults>
</compile_context>

<pallas_src>
import functools

import jax
import jax.numpy as jnp
from jax import lax
from jax.experimental import pallas as pl
from jax.experimental.pallas import tpu as pltpu

HIDDEN = 32
NUM_LAYERS = 2
DROPOUT = 0.3  # inactive at inference (identity)


def lstm_drop_kernel(slab_ref, out_ref, *, hidden, seq_len, batch):
    H, T, B = hidden, seq_len, batch
    H2 = 2 * H                       # combined hidden width [layer0 | layer1]

    # ---- one-time loads / precompute (prologue, off the recurrence) ---------
    wcomb = slab_ref[0:H2, :].astype(jnp.bfloat16)         # (2H, 8H) MXU RHS
    wih0_row = slab_ref[H2 + 0:H2 + 1, :]                  # (1, 8H) x weights
    b_row = slab_ref[H2 + 1:H2 + 2, :]                     # (1, 8H) fused biases
    wfc_row = slab_ref[H2 + 2:H2 + 3, 0:H2]                # (1, 2H) fc1 weights
    bfc = slab_ref[H2 + 3:H2 + 4, 0:1]                     # (1, 1)  fc1 bias
    x_bt = slab_ref[H2 + 8:H2 + 8 + B, 0:T]                # (B, T)  inputs

    # Hoisted layer-0 input contribution + both layers' biases, per time step
    # (kept in vregs; ~2 vregs per step).
    pre = [x_bt[:, t:t + 1] * wih0_row + b_row for t in range(T)]   # (B, 8H)

    def cell(gates, c_prev):
        # Fused gate lanes: [ i0 i1 | f0 f1 | o0 o1 | g0 g1 ], each block 2H
        # wide (layer0 then layer1), matching the combined (B, 2H) h/c layout.
        # One sigmoid over 6H lanes + one tanh over 2H lanes (EUP), then a
        # single combined (B, 2H) c/h update for both layers (VPU).
        sg = jax.nn.sigmoid(gates[:, 0:3 * H2])            # i | f | o
        g = jnp.tanh(gates[:, 3 * H2:4 * H2])               # g
        c_new = sg[:, H2:2 * H2] * c_prev + sg[:, 0:H2] * g
        h_new = sg[:, 2 * H2:3 * H2] * jnp.tanh(c_new)
        return h_new, c_new

    # ---- prologue: t = 0 -----------------------------------------------------
    # h(-1) = c(-1) = 0 for both layers, so gates = pre[0].  Only the layer-0
    # half of the result is real; the layer-1 half (a bogus "t = -1" update
    # driven by b1 alone) is masked back to the zero initial state.
    lane = lax.broadcasted_iota(jnp.int32, (1, H2), 1)
    l0mask = (lane < H).astype(jnp.float32)
    h_t0, c_t0 = cell(pre[0], jnp.zeros((B, H2), jnp.float32))
    h = h_t0 * l0mask                                       # [h0(0) | 0]
    c = c_t0 * l0mask                                       # [c0(0) | 0]

    # ---- skewed recurrence: step s computes layer0(s) and layer1(s-1) -------
    # carry h = [h0(s-1) | h1(s-2)] is exactly the next matmul LHS.
    for s in range(1, T):
        gates = jnp.dot(h.astype(jnp.bfloat16), wcomb,
                        preferred_element_type=jnp.float32) + pre[s]
        h, c = cell(gates, c)

    # ---- epilogue: layer-1 at t = T-1 ----------------------------------------
    # Reuse the fused step; the layer-0 lanes compute a discarded dummy update.
    gates = jnp.dot(h.astype(jnp.bfloat16), wcomb,
                    preferred_element_type=jnp.float32) + b_row
    h, _ = cell(gates, c)

    # ---- fc1 on the top-layer last hidden state (lane reduction, no matmul) --
    out_ref[...] = jnp.sum(h * wfc_row, axis=-1, keepdims=True) + bfc


def _build_slab(x, params, B_pad):
    """Pack weights, biases, fc params and inputs into one (2H+8+B_pad, 8H)
    f32 slab (single DMA).  Gate columns are reordered to the fused
    [i0 i1 | f0 f1 | o0 o1 | g0 g1] layout expected by the kernel."""
    (wih0, whh0, bih0, bhh0, wih1, whh1, bih1, bhh1, wfc, bfc) = params
    B, T, _ = x.shape
    H = whh0.shape[1]
    G2 = 8 * H
    f32 = jnp.float32

    b0 = (bih0 + bhh0).astype(f32)                  # (4H,)
    b1 = (bih1 + bhh1).astype(f32)                  # (4H,)
    t_h0 = whh0.T.astype(f32)                       # (H, 4H): h0 -> layer-0 gates
    t_x1 = wih1.T.astype(f32)                       # (H, 4H): h0 -> layer-1 gates
    t_h1 = whh1.T.astype(f32)                       # (H, 4H): h1 -> layer-1 gates
    wih0v = wih0.reshape(4 * H).astype(f32)         # (4H,)
    zHH = jnp.zeros((H, H), f32)
    zH = jnp.zeros((H,), f32)

    order = (0, 1, 3, 2)   # PyTorch gate blocks [i, f, g, o] -> fused [i, f, o, g]
    top, bot, wx, bc = [], [], [], []
    for k in order:
        sl = slice(k * H, (k + 1) * H)
        top += [t_h0[:, sl], t_x1[:, sl]]
        bot += [zHH, t_h1[:, sl]]
        wx += [wih0v[sl], zH]
        bc += [b0[sl], b1[sl]]
    wcomb = jnp.concatenate([jnp.concatenate(top, axis=1),
                             jnp.concatenate(bot, axis=1)], axis=0)   # (2H, 8H)
    row_wih0 = jnp.concatenate(wx).reshape(1, G2)
    row_b = jnp.concatenate(bc).reshape(1, G2)

    wfc_full = jnp.concatenate([zH, wfc.reshape(H).astype(f32)]).reshape(1, 2 * H)
    row_wfc = jnp.pad(wfc_full, ((0, 0), (0, G2 - 2 * H)))
    row_bfc = jnp.pad(bfc.reshape(1, 1).astype(f32), ((0, 0), (0, G2 - 1)))
    pad4 = jnp.zeros((4, G2), f32)

    x_rows = jnp.pad(x[:, :, 0].astype(f32), ((0, B_pad - B), (0, G2 - T)))
    return jnp.concatenate(
        [wcomb, row_wih0, row_b, row_wfc, row_bfc, pad4, x_rows], axis=0)


@jax.jit
def lstm_drop_forward(x, params):
    """x: (B, T, 1) float32.  Returns (B, 1) float32."""
    B, T, _ = x.shape
    H = params[1].shape[1]
    B_pad = max(8, ((B + 7) // 8) * 8)          # sublane-dense batch
    slab = _build_slab(x, params, B_pad)

    kernel = functools.partial(lstm_drop_kernel, hidden=H, seq_len=T,
                               batch=B_pad)
    out = pl.pallas_call(
        kernel,
        out_shape=jax.ShapeDtypeStruct((B_pad, 1), jnp.float32),
        in_specs=[pl.BlockSpec(memory_space=pltpu.MemorySpace.VMEM)],
        out_specs=pl.BlockSpec(memory_space=pltpu.MemorySpace.VMEM),
    )(slab)
    return out[:B]


def reference_forward(x, params):
    """Pure-JAX f32 reference with PyTorch nn.LSTM eval semantics."""
    (wih0, whh0, bih0, bhh0,
     wih1, whh1, bih1, bhh1,
     wfc, bfc) = params
    B, T, _ = x.shape
    H = whh0.shape[1]

    def cell(x_t, h, c, wih, whh, bih, bhh):
        g = x_t @ wih.T + h @ whh.T + bih + bhh
        i = jax.nn.sigmoid(g[:, 0 * H:1 * H])
        f = jax.nn.sigmoid(g[:, 1 * H:2 * H])
        gg = jnp.tanh(g[:, 2 * H:3 * H])
        o = jax.nn.sigmoid(g[:, 3 * H:4 * H])
        c = f * c + i * gg
        h = o * jnp.tanh(c)
        return h, c

    h0 = c0 = h1 = c1 = jnp.zeros((B, H), jnp.float32)
    for t in range(T):
        x_t = x[:, t, :]                              # (B, 1)
        h0, c0 = cell(x_t, h0, c0, wih0, whh0, bih0, bhh0)
        h1, c1 = cell(h0, h1, c1, wih1, whh1, bih1, bhh1)
    return h1 @ wfc.T + bfc


def init_params(key, hidden_size):
    H = hidden_size
    k = 1.0 / jnp.sqrt(H)
    keys = jax.random.split(key, 10)
    u = lambda kk, shape: jax.random.uniform(kk, shape, jnp.float32, -k, k)
    wih0 = u(keys[0], (4 * H, 1))
    whh0 = u(keys[1], (4 * H, H))
    bih0 = u(keys[2], (4 * H,))
    bhh0 = u(keys[3], (4 * H,))
    wih1 = u(keys[4], (4 * H, H))
    whh1 = u(keys[5], (4 * H, H))
    bih1 = u(keys[6], (4 * H,))
    bhh1 = u(keys[7], (4 * H,))
    wfc = u(keys[8], (1, H))
    bfc = u(keys[9], (1,))
    return (wih0, whh0, bih0, bhh0, wih1, whh1, bih1, bhh1, wfc, bfc)


if __name__ == "__main__":
    key = jax.random.PRNGKey(0)
    kx, kp = jax.random.split(key)

    B, T = 2, 8
    x = jax.random.normal(kx, (B, T, 1), jnp.float32)
    params = init_params(kp, HIDDEN)

    out = lstm_drop_forward(x, params)
    out = jax.block_until_ready(out)

    ref = reference_forward(x, params)
    assert out.shape == (B, 1)
    # bf16 MXU operands (f32 accumulation / elementwise) -> loosened tolerance.
    assert jnp.allclose(out, ref, atol=1e-2, rtol=1e-2), (out, ref)

    print("KERNEL_OK")
</pallas_src>

<mosaic_0001>
module attributes {stable_mosaic.version = 11 : i64} {
  func.func @lstm_drop_kernel(%arg0: memref<80x256xf32, #tpu.memory_space<vmem>>, %arg1: memref<8x1xf32, #tpu.memory_space<vmem>>) attributes {dimension_semantics = [], scalar_prefetch = 0 : i64, scratch_operands = 0 : i64, tpu.core_type = #tpu.core_type<tc>} {
    %c0 = arith.constant 0 : index
    %c0_0 = arith.constant 0 : index
    %0 = vector.load %arg0[%c0, %c0_0] : memref<80x256xf32, #tpu.memory_space<vmem>>, vector<64x256xf32>
    %1 = arith.truncf %0 : vector<64x256xf32> to vector<64x256xbf16>
    %c64 = arith.constant 64 : index
    %c0_1 = arith.constant 0 : index
    %2 = vector.load %arg0[%c64, %c0_1] : memref<80x256xf32, #tpu.memory_space<vmem>>, vector<1x256xf32>
    %c65 = arith.constant 65 : index
    %c0_2 = arith.constant 0 : index
    %3 = vector.load %arg0[%c65, %c0_2] : memref<80x256xf32, #tpu.memory_space<vmem>>, vector<1x256xf32>
    %c66 = arith.constant 66 : index
    %c0_3 = arith.constant 0 : index
    %4 = vector.load %arg0[%c66, %c0_3] : memref<80x256xf32, #tpu.memory_space<vmem>>, vector<1x64xf32>
    %c67 = arith.constant 67 : index
    %c0_4 = arith.constant 0 : index
    %5 = vector.load %arg0[%c67, %c0_4] : memref<80x256xf32, #tpu.memory_space<vmem>>, vector<1x1xf32>
    %c72 = arith.constant 72 : index
    %c0_5 = arith.constant 0 : index
    %6 = vector.load %arg0[%c72, %c0_5] : memref<80x256xf32, #tpu.memory_space<vmem>>, vector<8x8xf32>
    %7 = vector.extract_strided_slice %6 {offsets = [0, 0], sizes = [8, 1], strides = [1, 1]} : vector<8x8xf32> to vector<8x1xf32>
    %8 = vector.broadcast %7 : vector<8x1xf32> to vector<8x256xf32>
    %9 = vector.broadcast %2 : vector<1x256xf32> to vector<8x256xf32>
    %10 = arith.mulf %8, %9 : vector<8x256xf32>
    %11 = vector.broadcast %3 : vector<1x256xf32> to vector<8x256xf32>
    %12 = arith.addf %10, %11 : vector<8x256xf32>
    %13 = vector.extract_strided_slice %6 {offsets = [0, 1], sizes = [8, 1], strides = [1, 1]} : vector<8x8xf32> to vector<8x1xf32>
    %14 = vector.broadcast %13 : vector<8x1xf32> to vector<8x256xf32>
    %15 = vector.broadcast %2 : vector<1x256xf32> to vector<8x256xf32>
    %16 = arith.mulf %14, %15 : vector<8x256xf32>
    %17 = vector.broadcast %3 : vector<1x256xf32> to vector<8x256xf32>
    %18 = arith.addf %16, %17 : vector<8x256xf32>
    %19 = vector.extract_strided_slice %6 {offsets = [0, 2], sizes = [8, 1], strides = [1, 1]} : vector<8x8xf32> to vector<8x1xf32>
    %20 = vector.broadcast %19 : vector<8x1xf32> to vector<8x256xf32>
    %21 = vector.broadcast %2 : vector<1x256xf32> to vector<8x256xf32>
    %22 = arith.mulf %20, %21 : vector<8x256xf32>
    %23 = vector.broadcast %3 : vector<1x256xf32> to vector<8x256xf32>
    %24 = arith.addf %22, %23 : vector<8x256xf32>
    %25 = vector.extract_strided_slice %6 {offsets = [0, 3], sizes = [8, 1], strides = [1, 1]} : vector<8x8xf32> to vector<8x1xf32>
    %26 = vector.broadcast %25 : vector<8x1xf32> to vector<8x256xf32>
    %27 = vector.broadcast %2 : vector<1x256xf32> to vector<8x256xf32>
    %28 = arith.mulf %26, %27 : vector<8x256xf32>
    %29 = vector.broadcast %3 : vector<1x256xf32> to vector<8x256xf32>
    %30 = arith.addf %28, %29 : vector<8x256xf32>
    %31 = vector.extract_strided_slice %6 {offsets = [0, 4], sizes = [8, 1], strides = [1, 1]} : vector<8x8xf32> to vector<8x1xf32>
    %32 = vector.broadcast %31 : vector<8x1xf32> to vector<8x256xf32>
    %33 = vector.broadcast %2 : vector<1x256xf32> to vector<8x256xf32>
    %34 = arith.mulf %32, %33 : vector<8x256xf32>
    %35 = vector.broadcast %3 : vector<1x256xf32> to vector<8x256xf32>
    %36 = arith.addf %34, %35 : vector<8x256xf32>
    %37 = vector.extract_strided_slice %6 {offsets = [0, 5], sizes = [8, 1], strides = [1, 1]} : vector<8x8xf32> to vector<8x1xf32>
    %38 = vector.broadcast %37 : vector<8x1xf32> to vector<8x256xf32>
    %39 = vector.broadcast %2 : vector<1x256xf32> to vector<8x256xf32>
    %40 = arith.mulf %38, %39 : vector<8x256xf32>
    %41 = vector.broadcast %3 : vector<1x256xf32> to vector<8x256xf32>
    %42 = arith.addf %40, %41 : vector<8x256xf32>
    %43 = vector.extract_strided_slice %6 {offsets = [0, 6], sizes = [8, 1], strides = [1, 1]} : vector<8x8xf32> to vector<8x1xf32>
    %44 = vector.broadcast %43 : vector<8x1xf32> to vector<8x256xf32>
    %45 = vector.broadcast %2 : vector<1x256xf32> to vector<8x256xf32>
    %46 = arith.mulf %44, %45 : vector<8x256xf32>
    %47 = vector.broadcast %3 : vector<1x256xf32> to vector<8x256xf32>
    %48 = arith.addf %46, %47 : vector<8x256xf32>
    %49 = vector.extract_strided_slice %6 {offsets = [0, 7], sizes = [8, 1], strides = [1, 1]} : vector<8x8xf32> to vector<8x1xf32>
    %50 = vector.broadcast %49 : vector<8x1xf32> to vector<8x256xf32>
    %51 = vector.broadcast %2 : vector<1x256xf32> to vector<8x256xf32>
    %52 = arith.mulf %50, %51 : vector<8x256xf32>
    %53 = vector.broadcast %3 : vector<1x256xf32> to vector<8x256xf32>
    %54 = arith.addf %52, %53 : vector<8x256xf32>
    %55 = tpu.iota {dimensions = array<i32: 1>} : vector<1x64xi32>
    %c32_i32 = arith.constant 32 : i32
    %56 = vector.broadcast %c32_i32 : i32 to vector<1x64xi32>
    %57 = arith.cmpi slt, %55, %56 : vector<1x64xi32>
    %58 = arith.extui %57 : vector<1x64xi1> to vector<1x64xi32>
    %59 = arith.sitofp %58 : vector<1x64xi32> to vector<1x64xf32>
    %cst = arith.constant 0.000000e+00 : f32
    %60 = vector.broadcast %cst : f32 to vector<8x64xf32>
    %61 = vector.extract_strided_slice %12 {offsets = [0, 0], sizes = [8, 192], strides = [1, 1]} : vector<8x256xf32> to vector<8x192xf32>
    %62 = arith.negf %61 : vector<8x192xf32>
    %63 = math.exp %62 : vector<8x192xf32>
    %cst_6 = arith.constant 1.000000e+00 : f32
    %64 = vector.broadcast %cst_6 : f32 to vector<8x192xf32>
    %65 = arith.addf %64, %63 : vector<8x192xf32>
    %66 = arith.divf %64, %65 : vector<8x192xf32>
    %67 = vector.extract_strided_slice %12 {offsets = [0, 192], sizes = [8, 64], strides = [1, 1]} : vector<8x256xf32> to vector<8x64xf32>
    %68 = math.tanh %67 : vector<8x64xf32>
    %69 = vector.extract_strided_slice %66 {offsets = [0, 64], sizes = [8, 64], strides = [1, 1]} : vector<8x192xf32> to vector<8x64xf32>
    %70 = arith.mulf %69, %60 : vector<8x64xf32>
    %71 = vector.extract_strided_slice %66 {offsets = [0, 0], sizes = [8, 64], strides = [1, 1]} : vector<8x192xf32> to vector<8x64xf32>
    %72 = arith.mulf %71, %68 : vector<8x64xf32>
    %73 = arith.addf %70, %72 : vector<8x64xf32>
    %74 = vector.extract_strided_slice %66 {offsets = [0, 128], sizes = [8, 64], strides = [1, 1]} : vector<8x192xf32> to vector<8x64xf32>
    %75 = math.tanh %73 : vector<8x64xf32>
    %76 = arith.mulf %74, %75 : vector<8x64xf32>
    %77 = vector.broadcast %59 : vector<1x64xf32> to vector<8x64xf32>
    %78 = arith.mulf %76, %77 : vector<8x64xf32>
    %79 = vector.broadcast %59 : vector<1x64xf32> to vector<8x64xf32>
    %80 = arith.mulf %73, %79 : vector<8x64xf32>
    %81 = arith.truncf %78 : vector<8x64xf32> to vector<8x64xbf16>
    %cst_7 = arith.constant dense<0.000000e+00> : vector<8x256xf32>
    %82 = tpu.matmul %81, %1, %cst_7 {dimension_numbers = #tpu.dot_dimension_numbers<[1], [0], [0], [1], [0, 0, 1, 1], [], []>} : vector<8x64xbf16>, vector<64x256xbf16>, vector<8x256xf32> -> vector<8x256xf32>
    %83 = arith.addf %82, %18 : vector<8x256xf32>
    %84 = vector.extract_strided_slice %83 {offsets = [0, 0], sizes = [8, 192], strides = [1, 1]} : vector<8x256xf32> to vector<8x192xf32>
    %85 = arith.negf %84 : vector<8x192xf32>
    %86 = math.exp %85 : vector<8x192xf32>
    %cst_8 = arith.constant 1.000000e+00 : f32
    %87 = vector.broadcast %cst_8 : f32 to vector<8x192xf32>
    %88 = arith.addf %87, %86 : vector<8x192xf32>
    %89 = arith.divf %87, %88 : vector<8x192xf32>
    %90 = vector.extract_strided_slice %83 {offsets = [0, 192], sizes = [8, 64], strides = [1, 1]} : vector<8x256xf32> to vector<8x64xf32>
    %91 = math.tanh %90 : vector<8x64xf32>
    %92 = vector.extract_strided_slice %89 {offsets = [0, 64], sizes = [8, 64], strides = [1, 1]} : vector<8x192xf32> to vector<8x64xf32>
    %93 = arith.mulf %92, %80 : vector<8x64xf32>
    %94 = vector.extract_strided_slice %89 {offsets = [0, 0], sizes = [8, 64], strides = [1, 1]} : vector<8x192xf32> to vector<8x64xf32>
    %95 = arith.mulf %94, %91 : vector<8x64xf32>
    %96 = arith.addf %93, %95 : vector<8x64xf32>
    %97 = vector.extract_strided_slice %89 {offsets = [0, 128], sizes = [8, 64], strides = [1, 1]} : vector<8x192xf32> to vector<8x64xf32>
    %98 = math.tanh %96 : vector<8x64xf32>
    %99 = arith.mulf %97, %98 : vector<8x64xf32>
    %100 = arith.truncf %99 : vector<8x64xf32> to vector<8x64xbf16>
    %cst_9 = arith.constant dense<0.000000e+00> : vector<8x256xf32>
    %101 = tpu.matmul %100, %1, %cst_9 {dimension_numbers = #tpu.dot_dimension_numbers<[1], [0], [0], [1], [0, 0, 1, 1], [], []>} : vector<8x64xbf16>, vector<64x256xbf16>, vector<8x256xf32> -> vector<8x256xf32>
    %102 = arith.addf %101, %24 : vector<8x256xf32>
    %103 = vector.extract_strided_slice %102 {offsets = [0, 0], sizes = [8, 192], strides = [1, 1]} : vector<8x256xf32> to vector<8x192xf32>
    %104 = arith.negf %103 : vector<8x192xf32>
    %105 = math.exp %104 : vector<8x192xf32>
    %cst_10 = arith.constant 1.000000e+00 : f32
    %106 = vector.broadcast %cst_10 : f32 to vector<8x192xf32>
    %107 = arith.addf %106, %105 : vector<8x192xf32>
    %108 = arith.divf %106, %107 : vector<8x192xf32>
    %109 = vector.extract_strided_slice %102 {offsets = [0, 192], sizes = [8, 64], strides = [1, 1]} : vector<8x256xf32> to vector<8x64xf32>
    %110 = math.tanh %109 : vector<8x64xf32>
    %111 = vector.extract_strided_slice %108 {offsets = [0, 64], sizes = [8, 64], strides = [1, 1]} : vector<8x192xf32> to vector<8x64xf32>
    %112 = arith.mulf %111, %96 : vector<8x64xf32>
    %113 = vector.extract_strided_slice %108 {offsets = [0, 0], sizes = [8, 64], strides = [1, 1]} : vector<8x192xf32> to vector<8x64xf32>
    %114 = arith.mulf %113, %110 : vector<8x64xf32>
    %115 = arith.addf %112, %114 : vector<8x64xf32>
    %116 = vector.extract_strided_slice %108 {offsets = [0, 128], sizes = [8, 64], strides = [1, 1]} : vector<8x192xf32> to vector<8x64xf32>
    %117 = math.tanh %115 : vector<8x64xf32>
    %118 = arith.mulf %116, %117 : vector<8x64xf32>
    %119 = arith.truncf %118 : vector<8x64xf32> to vector<8x64xbf16>
    %cst_11 = arith.constant dense<0.000000e+00> : vector<8x256xf32>
    %120 = tpu.matmul %119, %1, %cst_11 {dimension_numbers = #tpu.dot_dimension_numbers<[1], [0], [0], [1], [0, 0, 1, 1], [], []>} : vector<8x64xbf16>, vector<64x256xbf16>, vector<8x256xf32> -> vector<8x256xf32>
    %121 = arith.addf %120, %30 : vector<8x256xf32>
    %122 = vector.extract_strided_slice %121 {offsets = [0, 0], sizes = [8, 192], strides = [1, 1]} : vector<8x256xf32> to vector<8x192xf32>
    %123 = arith.negf %122 : vector<8x192xf32>
    %124 = math.exp %123 : vector<8x192xf32>
    %cst_12 = arith.constant 1.000000e+00 : f32
    %125 = vector.broadcast %cst_12 : f32 to vector<8x192xf32>
    %126 = arith.addf %125, %124 : vector<8x192xf32>
    %127 = arith.divf %125, %126 : vector<8x192xf32>
    %128 = vector.extract_strided_slice %121 {offsets = [0, 192], sizes = [8, 64], strides = [1, 1]} : vector<8x256xf32> to vector<8x64xf32>
    %129 = math.tanh %128 : vector<8x64xf32>
    %130 = vector.extract_strided_slice %127 {offsets = [0, 64], sizes = [8, 64], strides = [1, 1]} : vector<8x192xf32> to vector<8x64xf32>
    %131 = arith.mulf %130, %115 : vector<8x64xf32>
    %132 = vector.extract_strided_slice %127 {offsets = [0, 0], sizes = [8, 64], strides = [1, 1]} : vector<8x192xf32> to vector<8x64xf32>
    %133 = arith.mulf %132, %129 : vector<8x64xf32>
    %134 = arith.addf %131, %133 : vector<8x64xf32>
    %135 = vector.extract_strided_slice %127 {offsets = [0, 128], sizes = [8, 64], strides = [1, 1]} : vector<8x192xf32> to vector<8x64xf32>
    %136 = math.tanh %134 : vector<8x64xf32>
    %137 = arith.mulf %135, %136 : vector<8x64xf32>
    %138 = arith.truncf %137 : vector<8x64xf32> to vector<8x64xbf16>
    %cst_13 = arith.constant dense<0.000000e+00> : vector<8x256xf32>
    %139 = tpu.matmul %138, %1, %cst_13 {dimension_numbers = #tpu.dot_dimension_numbers<[1], [0], [0], [1], [0, 0, 1, 1], [], []>} : vector<8x64xbf16>, vector<64x256xbf16>, vector<8x256xf32> -> vector<8x256xf32>
    %140 = arith.addf %139, %36 : vector<8x256xf32>
    %141 = vector.extract_strided_slice %140 {offsets = [0, 0], sizes = [8, 192], strides = [1, 1]} : vector<8x256xf32> to vector<8x192xf32>
    %142 = arith.negf %141 : vector<8x192xf32>
    %143 = math.exp %142 : vector<8x192xf32>
    %cst_14 = arith.constant 1.000000e+00 : f32
    %144 = vector.broadcast %cst_14 : f32 to vector<8x192xf32>
    %145 = arith.addf %144, %143 : vector<8x192xf32>
    %146 = arith.divf %144, %145 : vector<8x192xf32>
    %147 = vector.extract_strided_slice %140 {offsets = [0, 192], sizes = [8, 64], strides = [1, 1]} : vector<8x256xf32> to vector<8x64xf32>
    %148 = math.tanh %147 : vector<8x64xf32>
    %149 = vector.extract_strided_slice %146 {offsets = [0, 64], sizes = [8, 64], strides = [1, 1]} : vector<8x192xf32> to vector<8x64xf32>
    %150 = arith.mulf %149, %134 : vector<8x64xf32>
    %151 = vector.extract_strided_slice %146 {offsets = [0, 0], sizes = [8, 64], strides = [1, 1]} : vector<8x192xf32> to vector<8x64xf32>
    %152 = arith.mulf %151, %148 : vector<8x64xf32>
    %153 = arith.addf %150, %152 : vector<8x64xf32>
    %154 = vector.extract_strided_slice %146 {offsets = [0, 128], sizes = [8, 64], strides = [1, 1]} : vector<8x192xf32> to vector<8x64xf32>
    %155 = math.tanh %153 : vector<8x64xf32>
    %156 = arith.mulf %154, %155 : vector<8x64xf32>
    %157 = arith.truncf %156 : vector<8x64xf32> to vector<8x64xbf16>
    %cst_15 = arith.constant dense<0.000000e+00> : vector<8x256xf32>
    %158 = tpu.matmul %157, %1, %cst_15 {dimension_numbers = #tpu.dot_dimension_numbers<[1], [0], [0], [1], [0, 0, 1, 1], [], []>} : vector<8x64xbf16>, vector<64x256xbf16>, vector<8x256xf32> -> vector<8x256xf32>
    %159 = arith.addf %158, %42 : vector<8x256xf32>
    %160 = vector.extract_strided_slice %159 {offsets = [0, 0], sizes = [8, 192], strides = [1, 1]} : vector<8x256xf32> to vector<8x192xf32>
    %161 = arith.negf %160 : vector<8x192xf32>
    %162 = math.exp %161 : vector<8x192xf32>
    %cst_16 = arith.constant 1.000000e+00 : f32
    %163 = vector.broadcast %cst_16 : f32 to vector<8x192xf32>
    %164 = arith.addf %163, %162 : vector<8x192xf32>
    %165 = arith.divf %163, %164 : vector<8x192xf32>
    %166 = vector.extract_strided_slice %159 {offsets = [0, 192], sizes = [8, 64], strides = [1, 1]} : vector<8x256xf32> to vector<8x64xf32>
    %167 = math.tanh %166 : vector<8x64xf32>
    %168 = vector.extract_strided_slice %165 {offsets = [0, 64], sizes = [8, 64], strides = [1, 1]} : vector<8x192xf32> to vector<8x64xf32>
    %169 = arith.mulf %168, %153 : vector<8x64xf32>
    %170 = vector.extract_strided_slice %165 {offsets = [0, 0], sizes = [8, 64], strides = [1, 1]} : vector<8x192xf32> to vector<8x64xf32>
    %171 = arith.mulf %170, %167 : vector<8x64xf32>
    %172 = arith.addf %169, %171 : vector<8x64xf32>
    %173 = vector.extract_strided_slice %165 {offsets = [0, 128], sizes = [8, 64], strides = [1, 1]} : vector<8x192xf32> to vector<8x64xf32>
    %174 = math.tanh %172 : vector<8x64xf32>
    %175 = arith.mulf %173, %174 : vector<8x64xf32>
    %176 = arith.truncf %175 : vector<8x64xf32> to vector<8x64xbf16>
    %cst_17 = arith.constant dense<0.000000e+00> : vector<8x256xf32>
    %177 = tpu.matmul %176, %1, %cst_17 {dimension_numbers = #tpu.dot_dimension_numbers<[1], [0], [0], [1], [0, 0, 1, 1], [], []>} : vector<8x64xbf16>, vector<64x256xbf16>, vector<8x256xf32> -> vector<8x256xf32>
    %178 = arith.addf %177, %48 : vector<8x256xf32>
    %179 = vector.extract_strided_slice %178 {offsets = [0, 0], sizes = [8, 192], strides = [1, 1]} : vector<8x256xf32> to vector<8x192xf32>
    %180 = arith.negf %179 : vector<8x192xf32>
    %181 = math.exp %180 : vector<8x192xf32>
    %cst_18 = arith.constant 1.000000e+00 : f32
    %182 = vector.broadcast %cst_18 : f32 to vector<8x192xf32>
    %183 = arith.addf %182, %181 : vector<8x192xf32>
    %184 = arith.divf %182, %183 : vector<8x192xf32>
    %185 = vector.extract_strided_slice %178 {offsets = [0, 192], sizes = [8, 64], strides = [1, 1]} : vector<8x256xf32> to vector<8x64xf32>
    %186 = math.tanh %185 : vector<8x64xf32>
    %187 = vector.extract_strided_slice %184 {offsets = [0, 64], sizes = [8, 64], strides = [1, 1]} : vector<8x192xf32> to vector<8x64xf32>
    %188 = arith.mulf %187, %172 : vector<8x64xf32>
    %189 = vector.extract_strided_slice %184 {offsets = [0, 0], sizes = [8, 64], strides = [1, 1]} : vector<8x192xf32> to vector<8x64xf32>
    %190 = arith.mulf %189, %186 : vector<8x64xf32>
    %191 = arith.addf %188, %190 : vector<8x64xf32>
    %192 = vector.extract_strided_slice %184 {offsets = [0, 128], sizes = [8, 64], strides = [1, 1]} : vector<8x192xf32> to vector<8x64xf32>
    %193 = math.tanh %191 : vector<8x64xf32>
    %194 = arith.mulf %192, %193 : vector<8x64xf32>
    %195 = arith.truncf %194 : vector<8x64xf32> to vector<8x64xbf16>
    %cst_19 = arith.constant dense<0.000000e+00> : vector<8x256xf32>
    %196 = tpu.matmul %195, %1, %cst_19 {dimension_numbers = #tpu.dot_dimension_numbers<[1], [0], [0], [1], [0, 0, 1, 1], [], []>} : vector<8x64xbf16>, vector<64x256xbf16>, vector<8x256xf32> -> vector<8x256xf32>
    %197 = arith.addf %196, %54 : vector<8x256xf32>
    %198 = vector.extract_strided_slice %197 {offsets = [0, 0], sizes = [8, 192], strides = [1, 1]} : vector<8x256xf32> to vector<8x192xf32>
    %199 = arith.negf %198 : vector<8x192xf32>
    %200 = math.exp %199 : vector<8x192xf32>
    %cst_20 = arith.constant 1.000000e+00 : f32
    %201 = vector.broadcast %cst_20 : f32 to vector<8x192xf32>
    %202 = arith.addf %201, %200 : vector<8x192xf32>
    %203 = arith.divf %201, %202 : vector<8x192xf32>
    %204 = vector.extract_strided_slice %197 {offsets = [0, 192], sizes = [8, 64], strides = [1, 1]} : vector<8x256xf32> to vector<8x64xf32>
    %205 = math.tanh %204 : vector<8x64xf32>
    %206 = vector.extract_strided_slice %203 {offsets = [0, 64], sizes = [8, 64], strides = [1, 1]} : vector<8x192xf32> to vector<8x64xf32>
    %207 = arith.mulf %206, %191 : vector<8x64xf32>
    %208 = vector.extract_strided_slice %203 {offsets = [0, 0], sizes = [8, 64], strides = [1, 1]} : vector<8x192xf32> to vector<8x64xf32>
    %209 = arith.mulf %208, %205 : vector<8x64xf32>
    %210 = arith.addf %207, %209 : vector<8x64xf32>
    %211 = vector.extract_strided_slice %203 {offsets = [0, 128], sizes = [8, 64], strides = [1, 1]} : vector<8x192xf32> to vector<8x64xf32>
    %212 = math.tanh %210 : vector<8x64xf32>
    %213 = arith.mulf %211, %212 : vector<8x64xf32>
    %214 = arith.truncf %213 : vector<8x64xf32> to vector<8x64xbf16>
    %cst_21 = arith.constant dense<0.000000e+00> : vector<8x256xf32>
    %215 = tpu.matmul %214, %1, %cst_21 {dimension_numbers = #tpu.dot_dimension_numbers<[1], [0], [0], [1], [0, 0, 1, 1], [], []>} : vector<8x64xbf16>, vector<64x256xbf16>, vector<8x256xf32> -> vector<8x256xf32>
    %216 = vector.broadcast %3 : vector<1x256xf32> to vector<8x256xf32>
    %217 = arith.addf %215, %216 : vector<8x256xf32>
    %218 = vector.extract_strided_slice %217 {offsets = [0, 0], sizes = [8, 192], strides = [1, 1]} : vector<8x256xf32> to vector<8x192xf32>
    %219 = arith.negf %218 : vector<8x192xf32>
    %220 = math.exp %219 : vector<8x192xf32>
    %cst_22 = arith.constant 1.000000e+00 : f32
    %221 = vector.broadcast %cst_22 : f32 to vector<8x192xf32>
    %222 = arith.addf %221, %220 : vector<8x192xf32>
    %223 = arith.divf %221, %222 : vector<8x192xf32>
    %224 = vector.extract_strided_slice %217 {offsets = [0, 192], sizes = [8, 64], strides = [1, 1]} : vector<8x256xf32> to vector<8x64xf32>
    %225 = math.tanh %224 : vector<8x64xf32>
    %226 = vector.extract_strided_slice %223 {offsets = [0, 64], sizes = [8, 64], strides = [1, 1]} : vector<8x192xf32> to vector<8x64xf32>
    %227 = arith.mulf %226, %210 : vector<8x64xf32>
    %228 = vector.extract_strided_slice %223 {offsets = [0, 0], sizes = [8, 64], strides = [1, 1]} : vector<8x192xf32> to vector<8x64xf32>
    %229 = arith.mulf %228, %225 : vector<8x64xf32>
    %230 = arith.addf %227, %229 : vector<8x64xf32>
    %231 = vector.extract_strided_slice %223 {offsets = [0, 128], sizes = [8, 64], strides = [1, 1]} : vector<8x192xf32> to vector<8x64xf32>
    %232 = math.tanh %230 : vector<8x64xf32>
    %233 = arith.mulf %231, %232 : vector<8x64xf32>
    %234 = vector.broadcast %4 : vector<1x64xf32> to vector<8x64xf32>
    %235 = arith.mulf %233, %234 : vector<8x64xf32>
    %cst_23 = arith.constant dense<0.000000e+00> : vector<8xf32>
    %236 = vector.multi_reduction <add>, %235, %cst_23 [1] : vector<8x64xf32> to vector<8xf32>
    %237 = vector.shape_cast %236 : vector<8xf32> to vector<8x1xf32>
    %238 = vector.broadcast %5 : vector<1x1xf32> to vector<8x1xf32>
    %239 = arith.addf %237, %238 : vector<8x1xf32>
    %c0_24 = arith.constant 0 : index
    %c0_25 = arith.constant 0 : index
    %240 = vector.load %arg1[%c0_24, %c0_25] : memref<8x1xf32, #tpu.memory_space<vmem>>, vector<8x1xf32>
    tpu.vector_store %arg1[%c0_24, %c0_25], %239 {strides = array<i32>} : memref<8x1xf32, #tpu.memory_space<vmem>>, vector<8x1xf32>,
    return
  }
}

</mosaic_0001>

<llo_original>
// kernel: lstm_drop_forward.1
$region0: #{lstm_drop_forward.1}
  #allocation0 [shape = 'u32[]', space=smem, size = 0x4, offset = 0x4, fixed_abs, tag = 'smem constant byte address 0x4 - core index']
  #allocation1 [shape = 'u32[144,128]{1,0:T(1,128)}', space=vmem, size = 0x12000, scoped, tag = 'internal scratch']
  %s0 = inlined_call_operand.vmem [shape: f32[80,256], index: 0, kind: input, shape index: {}]
  %s1 = inlined_call_operand.vmem [shape: f32[8,1], index: 1, kind: output, shape index: {}]
  %s2 = sld [smem:[#allocation0]]
  $region14: #{lstm_drop_forward.1} parent=0
    _
  %s4 = ssub.s32 1, %s2
  %s5 = scalar_select 0, %s4, %s2
  // Predicated region
  $region2: #{lstm_drop_forward.1} parent=0 // pred_check
    _
  $region3: #{lstm_drop_forward.1} parent=0 // pred_check_branch
    %7 = sbr.rel (0) target = $region5
  $region4: #{lstm_drop_forward.1} parent=0 // pred_region
    _
  $region5: #{lstm_drop_forward.1} parent=0 // pred_fallthru
    _
  %v9 = vld [vmem:[%s0] sm:$0xff]
  %v10 = vld [vmem:[%s0 + $0x8] sm:$0xff]
  %v11 = vld [vmem:[%s0 + $0x10] sm:$0xff]
  %v12 = vld [vmem:[%s0 + $0x18] sm:$0xff]
  %v13 = vld [vmem:[%s0 + $0x20] sm:$0xff]
  %v14 = vld [vmem:[%s0 + $0x28] sm:$0xff]
  %v15 = vld [vmem:[%s0 + $0x30] sm:$0xff]
  %v16 = vld [vmem:[%s0 + $0x38] sm:$0xff]
  %v17 = vld [vmem:[%s0 + $0x40] sm:$0xff]
  %v18 = vld [vmem:[%s0 + $0x48] sm:$0xff]
  %v19 = vld [vmem:[%s0 + $0x50] sm:$0xff]
  %v20 = vld [vmem:[%s0 + $0x58] sm:$0xff]
  %v21 = vld [vmem:[%s0 + $0x60] sm:$0xff]
  %v22 = vld [vmem:[%s0 + $0x68] sm:$0xff]
  %v23 = vld [vmem:[%s0 + $0x70] sm:$0xff]
  %v24 = vld [vmem:[%s0 + $0x78] sm:$0xff]
  %v25 = vpack.c.bf16 %v11, %v9
  %v26 = vpack.c.bf16 %v12, %v10
  %v27 = vpack.c.bf16 %v15, %v13
  %v28 = vpack.c.bf16 %v16, %v14
  %v29 = vpack.c.bf16 %v19, %v17
  %v30 = vpack.c.bf16 %v20, %v18
  %v31 = vpack.c.bf16 %v23, %v21
  %v32 = vpack.c.bf16 %v24, %v22
  %s33 = scalar_lea.vmem %s0, 128
  %v34 = vld [vmem:[%s33] ss:$8 sm:$0x3]
  %s35 = scalar_lea.vmem %s0, 129
  %v36 = vld [vmem:[%s35] ss:$8 sm:$0x3]
  %v37 = vld [vmem:[%s0 + $0x82] ss:$0 sm:$0xff]
  %v38 = vld [vmem:[%s0 + $0x83] ss:$0 sm:$0xff]
  %v39 = vld [vmem:[%s0 + $0x90] sm:$0xff]
  %41 = vset.pattern.permute.xlu0 0
  %42 = vperm.xlu0 %41, %v39
  %v43 = vpop.permute.xlu0 %42
  %v46 = vlaneseq
  %v47 = vshrl.u32 %v46, 7
  %v48 = vsub.s32 0, %v47
  %v49 = vrot.slane %v34, %v48
  %v50 = vlaneseq
  %v51 = vshrl.u32 %v50, 7
  %v52 = vsub.s32 1, %v51
  %v53 = vrot.slane %v34, %v52
  %v56 = vmul.f32 %v43, %v49
  %v57 = vmul.f32 %v43, %v53
  %v59 = vlaneseq
  %v60 = vshrl.u32 %v59, 7
  %v61 = vsub.s32 0, %v60
  %v62 = vrot.slane %v36, %v61
  %v63 = vlaneseq
  %v64 = vshrl.u32 %v63, 7
  %v65 = vsub.s32 1, %v64
  %v66 = vrot.slane %v36, %v65
  %v69 = vadd.f32 %v56, %v62
  %v70 = vadd.f32 %v57, %v66
  %71 = vset.pattern.permute.xlu0 1
  %72 = vperm.xlu0 %71, %v39
  %v73 = vpop.permute.xlu0 %72
  %v75 = vmul.f32 %v73, %v49
  %v76 = vmul.f32 %v73, %v53
  %v77 = vadd.f32 %v75, %v62
  %v78 = vadd.f32 %v76, %v66
  %79 = vset.pattern.permute.xlu0 2
  %80 = vperm.xlu0 %79, %v39
  %v81 = vpop.permute.xlu0 %80
  %v83 = vmul.f32 %v81, %v49
  %v84 = vmul.f32 %v81, %v53
  %v85 = vadd.f32 %v83, %v62
  %v86 = vadd.f32 %v84, %v66
  %87 = vset.pattern.permute.xlu0 3
  %88 = vperm.xlu0 %87, %v39
  %v89 = vpop.permute.xlu0 %88
  %v91 = vmul.f32 %v89, %v49
  %v92 = vmul.f32 %v89, %v53
  %v93 = vadd.f32 %v91, %v62
  %v94 = vadd.f32 %v92, %v66
  %95 = vset.pattern.permute.xlu0 4
  %96 = vperm.xlu0 %95, %v39
  %v97 = vpop.permute.xlu0 %96
  %v99 = vmul.f32 %v97, %v49
  %v100 = vmul.f32 %v97, %v53
  %v101 = vadd.f32 %v99, %v62
  %v102 = vadd.f32 %v100, %v66
  %103 = vset.pattern.permute.xlu0 5
  %104 = vperm.xlu0 %103, %v39
  %v105 = vpop.permute.xlu0 %104
  %v107 = vmul.f32 %v105, %v49
  %v108 = vmul.f32 %v105, %v53
  %v109 = vadd.f32 %v107, %v62
  %v110 = vadd.f32 %v108, %v66
  %111 = vset.pattern.permute.xlu0 6
  %112 = vperm.xlu0 %111, %v39
  %v113 = vpop.permute.xlu0 %112
  %v115 = vmul.f32 %v113, %v49
  %v116 = vmul.f32 %v113, %v53
  %v117 = vadd.f32 %v115, %v62
  %v118 = vadd.f32 %v116, %v66
  %119 = vset.pattern.permute.xlu0 7
  %120 = vperm.xlu0 %119, %v39
  %v121 = vpop.permute.xlu0 %120
  %v123 = vmul.f32 %v121, %v49
  %v124 = vmul.f32 %v121, %v53
  %v125 = vadd.f32 %v123, %v62
  %v126 = vadd.f32 %v124, %v66
  %v127 = vlaneseq
  %v128 = vand.u32 %v127, 127
  %vm129 = vcmp.lt.s32.totalorder %v128, 32
  %v130 = vsel %vm129, 1, 0
  %v131 = vcvt.s32.f32 %v130
  %v132 = vxor.u32 %v69, 2147483648
  %v133 = vxor.u32 %v70, 2147483648
  %v134 = vmul.f32 %v132, 1.442695
  %v135 = vpow.pop %v134
  %v136 = vmul.f32 %v133, 1.442695
  %v137 = vpow.pop %v136
  %v138 = vadd.f32 %v135, 1.0
  %v139 = vadd.f32 %v137, 1.0
  %v140 = vrcp.pop %v138
  %v141 = vmul.f32 1.0, %v140
  %v142 = vrcp.pop %v139
  %v143 = vmul.f32 1.0, %v142
  %v144 = vtanh.pop %v70
  %v145 = vmul.f32 %v141, 0.0
  %147 = vrot.lane.b32.xlu0 %v144, 64
  %v148 = vpop.permute.xlu0 %147
  %v150 = vmul.f32 %v141, %v148
  %152 = vrot.lane.b32.xlu0 %v150, 64
  %v153 = vpop.permute.xlu0 %152
  %v155 = vadd.f32 %v145, %v153
  %v156 = vtanh.pop %v155
  %158 = vrot.lane.b32.xlu0 %v156, 64
  %v159 = vpop.permute.xlu0 %158
  %v161 = vmul.f32 %v143, %v159
  %v162 = vmul.f32 %v161, %v131
  %164 = vrot.lane.b32.xlu0 %v131, 64
  %v165 = vpop.permute.xlu0 %164
  %v167 = vmul.f32 %v155, %v165
  %v168 = vpack.c.bf16 %v162, %v162
  %vm169 = vcmask 523264
  %v171 = vsel %vm169, %v168, 0
  %173 = vmatprep.subr.bf16.mxu0 0
  %174 = vmatpush1.bf16.msra.mxu0 0
  %175 = vmatprep.subr.bf16.mxu0 0
  %176 = vmatpush1.bf16.msra.mxu0 0
  %177 = vmatprep.subr.bf16.mxu0 0
  %178 = vmatpush1.bf16.msra.mxu0 0
  %179 = vmatprep.subr.bf16.mxu0 0
  %180 = vmatpush1.bf16.msra.mxu0 0
  %181 = vmatprep.subr.bf16.mxu0 %v32
  %182 = vmatpush1.bf16.msra.mxu0 %v31
  %183 = vmatprep.subr.bf16.mxu0 %v30
  %184 = vmatpush1.bf16.msra.mxu0 %v29
  %185 = vmatprep.subr.bf16.mxu0 %v28
  %186 = vmatpush1.bf16.msra.mxu0 %v27
  %187 = vmatprep.subr.bf16.mxu0 %v26
  %188 = vmatpush1.bf16.msra.mxu0 %v25
  %189 = vmatprep.subr.bf16.mxu0 0
  %190 = vmatpush2.bf16.msra.mxu0 0
  %191 = vmatprep.subr.bf16.mxu0 0
  %192 = vmatpush2.bf16.msra.mxu0 0
  %193 = vmatprep.subr.bf16.mxu0 0
  %194 = vmatpush2.bf16.msra.mxu0 0
  %195 = vmatprep.subr.bf16.mxu0 0
  %196 = vmatpush2.bf16.msra.mxu0 0
  %197 = vmatprep.subr.bf16.mxu0 0
  %198 = vmatpush2.bf16.msra.mxu0 0
  %199 = vmatprep.subr.bf16.mxu0 0
  %200 = vmatpush2.bf16.msra.mxu0 0
  %201 = vmatprep.subr.bf16.mxu0 0
  %202 = vmatpush2.bf16.msra.mxu0 0
  %203 = vmatprep.subr.bf16.mxu0 0
  %204 = vmatpush2.bf16.msra.mxu0 0
  %205 = vmatprep.mubr.bf16.mxu0 0
  %206 = vmatmul.mubr.bf16.gmra.mxu0 %v171
  %v207 = vpop.f32.mrf.mxu0
  %v208 = vadd.f32 %v77, %v207
  %v209 = vpop.f32.mrf.mxu0
  %v210 = vadd.f32 %v78, %v209
  %v211 = vpop.f32.mrf.mxu0
  %v212 = vpop.f32.mrf.mxu0
  %213 = vdwg.mxu0
  %v214 = vxor.u32 %v208, 2147483648
  %v215 = vxor.u32 %v210, 2147483648
  %v216 = vmul.f32 %v214, 1.442695
  %v217 = vpow.pop %v216
  %v218 = vmul.f32 %v215, 1.442695
  %v219 = vpow.pop %v218
  %v220 = vadd.f32 %v217, 1.0
  %v221 = vadd.f32 %v219, 1.0
  %v222 = vrcp.pop %v220
  %v223 = vmul.f32 1.0, %v222
  %v224 = vrcp.pop %v221
  %v225 = vmul.f32 1.0, %v224
  %v226 = vtanh.pop %v210
  %v227 = vmul.f32 %v223, %v167
  %229 = vrot.lane.b32.xlu0 %v226, 64
  %v230 = vpop.permute.xlu0 %229
  %v232 = vmul.f32 %v223, %v230
  %234 = vrot.lane.b32.xlu0 %v232, 64
  %v235 = vpop.permute.xlu0 %234
  %v237 = vadd.f32 %v227, %v235
  %v238 = vtanh.pop %v237
  %240 = vrot.lane.b32.xlu0 %v238, 64
  %v241 = vpop.permute.xlu0 %240
  %v243 = vmul.f32 %v225, %v241
  %v244 = vpack.c.bf16 %v243, %v243
  %v246 = vsel %vm169, %v244, 0
  %248 = vmatprep.subr.bf16.mxu0 0
  %249 = vmatpush1.bf16.msra.mxu0 0
  %250 = vmatprep.subr.bf16.mxu0 0
  %251 = vmatpush1.bf16.msra.mxu0 0
  %252 = vmatprep.subr.bf16.mxu0 0
  %253 = vmatpush1.bf16.msra.mxu0 0
  %254 = vmatprep.subr.bf16.mxu0 0
  %255 = vmatpush1.bf16.msra.mxu0 0
  %256 = vmatprep.subr.bf16.mxu0 %v32
  %257 = vmatpush1.bf16.msra.mxu0 %v31
  %258 = vmatprep.subr.bf16.mxu0 %v30
  %259 = vmatpush1.bf16.msra.mxu0 %v29
  %260 = vmatprep.subr.bf16.mxu0 %v28
  %261 = vmatpush1.bf16.msra.mxu0 %v27
  %262 = vmatprep.subr.bf16.mxu0 %v26
  %263 = vmatpush1.bf16.msra.mxu0 %v25
  %264 = vmatprep.subr.bf16.mxu0 0
  %265 = vmatpush2.bf16.msra.mxu0 0
  %266 = vmatprep.subr.bf16.mxu0 0
  %267 = vmatpush2.bf16.msra.mxu0 0
  %268 = vmatprep.subr.bf16.mxu0 0
  %269 = vmatpush2.bf16.msra.mxu0 0
  %270 = vmatprep.subr.bf16.mxu0 0
  %271 = vmatpush2.bf16.msra.mxu0 0
  %272 = vmatprep.subr.bf16.mxu0 0
  %273 = vmatpush2.bf16.msra.mxu0 0
  %274 = vmatprep.subr.bf16.mxu0 0
  %275 = vmatpush2.bf16.msra.mxu0 0
  %276 = vmatprep.subr.bf16.mxu0 0
  %277 = vmatpush2.bf16.msra.mxu0 0
  %278 = vmatprep.subr.bf16.mxu0 0
  %279 = vmatpush2.bf16.msra.mxu0 0
  %280 = vmatprep.mubr.bf16.mxu0 0
  %281 = vmatmul.mubr.bf16.gmra.mxu0 %v246
  %v282 = vpop.f32.mrf.mxu0
  %v283 = vadd.f32 %v85, %v282
  %v284 = vpop.f32.mrf.mxu0
  %v285 = vadd.f32 %v86, %v284
  %v286 = vpop.f32.mrf.mxu0
  %v287 = vpop.f32.mrf.mxu0
  %288 = vdwg.mxu0
  %v289 = vxor.u32 %v283, 2147483648
  %v290 = vxor.u32 %v285, 2147483648
  %v291 = vmul.f32 %v289, 1.442695
  %v292 = vpow.pop %v291
  %v293 = vmul.f32 %v290, 1.442695
  %v294 = vpow.pop %v293
  %v295 = vadd.f32 %v292, 1.0
  %v296 = vadd.f32 %v294, 1.0
  %v297 = vrcp.pop %v295
  %v298 = vmul.f32 1.0, %v297
  %v299 = vrcp.pop %v296
  %v300 = vmul.f32 1.0, %v299
  %v301 = vtanh.pop %v285
  %v302 = vmul.f32 %v298, %v237
  %304 = vrot.lane.b32.xlu0 %v301, 64
  %v305 = vpop.permute.xlu0 %304
  %v307 = vmul.f32 %v298, %v305
  %309 = vrot.lane.b32.xlu0 %v307, 64
  %v310 = vpop.permute.xlu0 %309
  %v312 = vadd.f32 %v302, %v310
  %v313 = vtanh.pop %v312
  %315 = vrot.lane.b32.xlu0 %v313, 64
  %v316 = vpop.permute.xlu0 %315
  %v318 = vmul.f32 %v300, %v316
  %v319 = vpack.c.bf16 %v318, %v318
  %v321 = vsel %vm169, %v319, 0
  %323 = vmatprep.subr.bf16.mxu0 0
  %324 = vmatpush1.bf16.msra.mxu0 0
  %325 = vmatprep.subr.bf16.mxu0 0
  %326 = vmatpush1.bf16.msra.mxu0 0
  %327 = vmatprep.subr.bf16.mxu0 0
  %328 = vmatpush1.bf16.msra.mxu0 0
  %329 = vmatprep.subr.bf16.mxu0 0
  %330 = vmatpush1.bf16.msra.mxu0 0
  %331 = vmatprep.subr.bf16.mxu0 %v32
  %332 = vmatpush1.bf16.msra.mxu0 %v31
  %333 = vmatprep.subr.bf16.mxu0 %v30
  %334 = vmatpush1.bf16.msra.mxu0 %v29
  %335 = vmatprep.subr.bf16.mxu0 %v28
  %336 = vmatpush1.bf16.msra.mxu0 %v27
  %337 = vmatprep.subr.bf16.mxu0 %v26
  %338 = vmatpush1.bf16.msra.mxu0 %v25
  %339 = vmatprep.subr.bf16.mxu0 0
  %340 = vmatpush2.bf16.msra.mxu0 0
  %341 = vmatprep.subr.bf16.mxu0 0
  %342 = vmatpush2.bf16.msra.mxu0 0
  %343 = vmatprep.subr.bf16.mxu0 0
  %344 = vmatpush2.bf16.msra.mxu0 0
  %345 = vmatprep.subr.bf16.mxu0 0
  %346 = vmatpush2.bf16.msra.mxu0 0
  %347 = vmatprep.subr.bf16.mxu0 0
  %348 = vmatpush2.bf16.msra.mxu0 0
  %349 = vmatprep.subr.bf16.mxu0 0
  %350 = vmatpush2.bf16.msra.mxu0 0
  %351 = vmatprep.subr.bf16.mxu0 0
  %352 = vmatpush2.bf16.msra.mxu0 0
  %353 = vmatprep.subr.bf16.mxu0 0
  %354 = vmatpush2.bf16.msra.mxu0 0
  %355 = vmatprep.mubr.bf16.mxu0 0
  %356 = vmatmul.mubr.bf16.gmra.mxu0 %v321
  %v357 = vpop.f32.mrf.mxu0
  %v358 = vadd.f32 %v93, %v357
  %v359 = vpop.f32.mrf.mxu0
  %v360 = vadd.f32 %v94, %v359
  %v361 = vpop.f32.mrf.mxu0
  %v362 = vpop.f32.mrf.mxu0
  %363 = vdwg.mxu0
  %v364 = vxor.u32 %v358, 2147483648
  %v365 = vxor.u32 %v360, 2147483648
  %v366 = vmul.f32 %v364, 1.442695
  %v367 = vpow.pop %v366
  %v368 = vmul.f32 %v365, 1.442695
  %v369 = vpow.pop %v368
  %v370 = vadd.f32 %v367, 1.0
  %v371 = vadd.f32 %v369, 1.0
  %v372 = vrcp.pop %v370
  %v373 = vmul.f32 1.0, %v372
  %v374 = vrcp.pop %v371
  %v375 = vmul.f32 1.0, %v374
  %v376 = vtanh.pop %v360
  %v377 = vmul.f32 %v373, %v312
  %379 = vrot.lane.b32.xlu0 %v376, 64
  %v380 = vpop.permute.xlu0 %379
  %v382 = vmul.f32 %v373, %v380
  %384 = vrot.lane.b32.xlu0 %v382, 64
  %v385 = vpop.permute.xlu0 %384
  %v387 = vadd.f32 %v377, %v385
  %v388 = vtanh.pop %v387
  %390 = vrot.lane.b32.xlu0 %v388, 64
  %v391 = vpop.permute.xlu0 %390
  %v393 = vmul.f32 %v375, %v391
  %v394 = vpack.c.bf16 %v393, %v393
  %v396 = vsel %vm169, %v394, 0
  %398 = vmatprep.subr.bf16.mxu0 0
  %399 = vmatpush1.bf16.msra.mxu0 0
  %400 = vmatprep.subr.bf16.mxu0 0
  %401 = vmatpush1.bf16.msra.mxu0 0
  %402 = vmatprep.subr.bf16.mxu0 0
  %403 = vmatpush1.bf16.msra.mxu0 0
  %404 = vmatprep.subr.bf16.mxu0 0
  %405 = vmatpush1.bf16.msra.mxu0 0
  %406 = vmatprep.subr.bf16.mxu0 %v32
  %407 = vmatpush1.bf16.msra.mxu0 %v31
  %408 = vmatprep.subr.bf16.mxu0 %v30
  %409 = vmatpush1.bf16.msra.mxu0 %v29
  %410 = vmatprep.subr.bf16.mxu0 %v28
  %411 = vmatpush1.bf16.msra.mxu0 %v27
  %412 = vmatprep.subr.bf16.mxu0 %v26
  %413 = vmatpush1.bf16.msra.mxu0 %v25
  %414 = vmatprep.subr.bf16.mxu0 0
  %415 = vmatpush2.bf16.msra.mxu0 0
  %416 = vmatprep.subr.bf16.mxu0 0
  %417 = vmatpush2.bf16.msra.mxu0 0
  %418 = vmatprep.subr.bf16.mxu0 0
  %419 = vmatpush2.bf16.msra.mxu0 0
  %420 = vmatprep.subr.bf16.mxu0 0
  %421 = vmatpush2.bf16.msra.mxu0 0
  %422 = vmatprep.subr.bf16.mxu0 0
  %423 = vmatpush2.bf16.msra.mxu0 0
  %424 = vmatprep.subr.bf16.mxu0 0
  %425 = vmatpush2.bf16.msra.mxu0 0
  %426 = vmatprep.subr.bf16.mxu0 0
  %427 = vmatpush2.bf16.msra.mxu0 0
  %428 = vmatprep.subr.bf16.mxu0 0
  %429 = vmatpush2.bf16.msra.mxu0 0
  %430 = vmatprep.mubr.bf16.mxu0 0
  %431 = vmatmul.mubr.bf16.gmra.mxu0 %v396
  %v432 = vpop.f32.mrf.mxu0
  %v433 = vadd.f32 %v101, %v432
  %v434 = vpop.f32.mrf.mxu0
  %v435 = vadd.f32 %v102, %v434
  %v436 = vpop.f32.mrf.mxu0
  %v437 = vpop.f32.mrf.mxu0
  %438 = vdwg.mxu0
  %v439 = vxor.u32 %v433, 2147483648
  %v440 = vxor.u32 %v435, 2147483648
  %v441 = vmul.f32 %v439, 1.442695
  %v442 = vpow.pop %v441
  %v443 = vmul.f32 %v440, 1.442695
  %v444 = vpow.pop %v443
  %v445 = vadd.f32 %v442, 1.0
  %v446 = vadd.f32 %v444, 1.0
  %v447 = vrcp.pop %v445
  %v448 = vmul.f32 1.0, %v447
  %v449 = vrcp.pop %v446
  %v450 = vmul.f32 1.0, %v449
  %v451 = vtanh.pop %v435
  %v452 = vmul.f32 %v448, %v387
  %454 = vrot.lane.b32.xlu0 %v451, 64
  %v455 = vpop.permute.xlu0 %454
  %v457 = vmul.f32 %v448, %v455
  %459 = vrot.lane.b32.xlu0 %v457, 64
  %v460 = vpop.permute.xlu0 %459
  %v462 = vadd.f32 %v452, %v460
  %v463 = vtanh.pop %v462
  %465 = vrot.lane.b32.xlu0 %v463, 64
  %v466 = vpop.permute.xlu0 %465
  %v468 = vmul.f32 %v450, %v466
  %v469 = vpack.c.bf16 %v468, %v468
  %v471 = vsel %vm169, %v469, 0
  %473 = vmatprep.subr.bf16.mxu0 0
  %474 = vmatpush1.bf16.msra.mxu0 0
  %475 = vmatprep.subr.bf16.mxu0 0
  %476 = vmatpush1.bf16.msra.mxu0 0
  %477 = vmatprep.subr.bf16.mxu0 0
  %478 = vmatpush1.bf16.msra.mxu0 0
  %479 = vmatprep.subr.bf16.mxu0 0
  %480 = vmatpush1.bf16.msra.mxu0 0
  %481 = vmatprep.subr.bf16.mxu0 %v32
  %482 = vmatpush1.bf16.msra.mxu0 %v31
  %483 = vmatprep.subr.bf16.mxu0 %v30
  %484 = vmatpush1.bf16.msra.mxu0 %v29
  %485 = vmatprep.subr.bf16.mxu0 %v28
  %486 = vmatpush1.bf16.msra.mxu0 %v27
  %487 = vmatprep.subr.bf16.mxu0 %v26
  %488 = vmatpush1.bf16.msra.mxu0 %v25
  %489 = vmatprep.subr.bf16.mxu0 0
  %490 = vmatpush2.bf16.msra.mxu0 0
  %491 = vmatprep.subr.bf16.mxu0 0
  %492 = vmatpush2.bf16.msra.mxu0 0
  %493 = vmatprep.subr.bf16.mxu0 0
  %494 = vmatpush2.bf16.msra.mxu0 0
  %495 = vmatprep.subr.bf16.mxu0 0
  %496 = vmatpush2.bf16.msra.mxu0 0
  %497 = vmatprep.subr.bf16.mxu0 0
  %498 = vmatpush2.bf16.msra.mxu0 0
  %499 = vmatprep.subr.bf16.mxu0 0
  %500 = vmatpush2.bf16.msra.mxu0 0
  %501 = vmatprep.subr.bf16.mxu0 0
  %502 = vmatpush2.bf16.msra.mxu0 0
  %503 = vmatprep.subr.bf16.mxu0 0
  %504 = vmatpush2.bf16.msra.mxu0 0
  %505 = vmatprep.mubr.bf16.mxu0 0
  %506 = vmatmul.mubr.bf16.gmra.mxu0 %v471
  %v507 = vpop.f32.mrf.mxu0
  %v508 = vadd.f32 %v109, %v507
  %v509 = vpop.f32.mrf.mxu0
  %v510 = vadd.f32 %v110, %v509
  %v511 = vpop.f32.mrf.mxu0
  %v512 = vpop.f32.mrf.mxu0
  %513 = vdwg.mxu0
  %v514 = vxor.u32 %v508, 2147483648
  %v515 = vxor.u32 %v510, 2147483648
  %v516 = vmul.f32 %v514, 1.442695
  %v517 = vpow.pop %v516
  %v518 = vmul.f32 %v515, 1.442695
  %v519 = vpow.pop %v518
  %v520 = vadd.f32 %v517, 1.0
  %v521 = vadd.f32 %v519, 1.0
  %v522 = vrcp.pop %v520
  %v523 = vmul.f32 1.0, %v522
  %v524 = vrcp.pop %v521
  %v525 = vmul.f32 1.0, %v524
  %v526 = vtanh.pop %v510
  %v527 = vmul.f32 %v523, %v462
  %529 = vrot.lane.b32.xlu0 %v526, 64
  %v530 = vpop.permute.xlu0 %529
  %v532 = vmul.f32 %v523, %v530
  %534 = vrot.lane.b32.xlu0 %v532, 64
  %v535 = vpop.permute.xlu0 %534
  %v537 = vadd.f32 %v527, %v535
  %v538 = vtanh.pop %v537
  %540 = vrot.lane.b32.xlu0 %v538, 64
  %v541 = vpop.permute.xlu0 %540
  %v543 = vmul.f32 %v525, %v541
  %v544 = vpack.c.bf16 %v543, %v543
  %v546 = vsel %vm169, %v544, 0
  %548 = vmatprep.subr.bf16.mxu0 0
  %549 = vmatpush1.bf16.msra.mxu0 0
  %550 = vmatprep.subr.bf16.mxu0 0
  %551 = vmatpush1.bf16.msra.mxu0 0
  %552 = vmatprep.subr.bf16.mxu0 0
  %553 = vmatpush1.bf16.msra.mxu0 0
  %554 = vmatprep.subr.bf16.mxu0 0
  %555 = vmatpush1.bf16.msra.mxu0 0
  %556 = vmatprep.subr.bf16.mxu0 %v32
  %557 = vmatpush1.bf16.msra.mxu0 %v31
  %558 = vmatprep.subr.bf16.mxu0 %v30
  %559 = vmatpush1.bf16.msra.mxu0 %v29
  %560 = vmatprep.subr.bf16.mxu0 %v28
  %561 = vmatpush1.bf16.msra.mxu0 %v27
  %562 = vmatprep.subr.bf16.mxu0 %v26
  %563 = vmatpush1.bf16.msra.mxu0 %v25
  %564 = vmatprep.subr.bf16.mxu0 0
  %565 = vmatpush2.bf16.msra.mxu0 0
  %566 = vmatprep.subr.bf16.mxu0 0
  %567 = vmatpush2.bf16.msra.mxu0 0
  %568 = vmatprep.subr.bf16.mxu0 0
  %569 = vmatpush2.bf16.msra.mxu0 0
  %570 = vmatprep.subr.bf16.mxu0 0
  %571 = vmatpush2.bf16.msra.mxu0 0
  %572 = vmatprep.subr.bf16.mxu0 0
  %573 = vmatpush2.bf16.msra.mxu0 0
  %574 = vmatprep.subr.bf16.mxu0 0
  %575 = vmatpush2.bf16.msra.mxu0 0
  %576 = vmatprep.subr.bf16.mxu0 0
  %577 = vmatpush2.bf16.msra.mxu0 0
  %578 = vmatprep.subr.bf16.mxu0 0
  %579 = vmatpush2.bf16.msra.mxu0 0
  %580 = vmatprep.mubr.bf16.mxu0 0
  %581 = vmatmul.mubr.bf16.gmra.mxu0 %v546
  %v582 = vpop.f32.mrf.mxu0
  %v583 = vadd.f32 %v117, %v582
  %v584 = vpop.f32.mrf.mxu0
  %v585 = vadd.f32 %v118, %v584
  %v586 = vpop.f32.mrf.mxu0
  %v587 = vpop.f32.mrf.mxu0
  %588 = vdwg.mxu0
  %v589 = vxor.u32 %v583, 2147483648
  %v590 = vxor.u32 %v585, 2147483648
  %v591 = vmul.f32 %v589, 1.442695
  %v592 = vpow.pop %v591
  %v593 = vmul.f32 %v590, 1.442695
  %v594 = vpow.pop %v593
  %v595 = vadd.f32 %v592, 1.0
  %v596 = vadd.f32 %v594, 1.0
  %v597 = vrcp.pop %v595
  %v598 = vmul.f32 1.0, %v597
  %v599 = vrcp.pop %v596
  %v600 = vmul.f32 1.0, %v599
  %v601 = vtanh.pop %v585
  %v602 = vmul.f32 %v598, %v537
  %604 = vrot.lane.b32.xlu0 %v601, 64
  %v605 = vpop.permute.xlu0 %604
  %v607 = vmul.f32 %v598, %v605
  %609 = vrot.lane.b32.xlu0 %v607, 64
  %v610 = vpop.permute.xlu0 %609
  %v612 = vadd.f32 %v602, %v610
  %v613 = vtanh.pop %v612
  %615 = vrot.lane.b32.xlu0 %v613, 64
  %v616 = vpop.permute.xlu0 %615
  %v618 = vmul.f32 %v600, %v616
  %v619 = vpack.c.bf16 %v618, %v618
  %v621 = vsel %vm169, %v619, 0
  %623 = vmatprep.subr.bf16.mxu0 0
  %624 = vmatpush1.bf16.msra.mxu0 0
  %625 = vmatprep.subr.bf16.mxu0 0
  %626 = vmatpush1.bf16.msra.mxu0 0
  %627 = vmatprep.subr.bf16.mxu0 0
  %628 = vmatpush1.bf16.msra.mxu0 0
  %629 = vmatprep.subr.bf16.mxu0 0
  %630 = vmatpush1.bf16.msra.mxu0 0
  %631 = vmatprep.subr.bf16.mxu0 %v32
  %632 = vmatpush1.bf16.msra.mxu0 %v31
  %633 = vmatprep.subr.bf16.mxu0 %v30
  %634 = vmatpush1.bf16.msra.mxu0 %v29
  %635 = vmatprep.subr.bf16.mxu0 %v28
  %636 = vmatpush1.bf16.msra.mxu0 %v27
  %637 = vmatprep.subr.bf16.mxu0 %v26
  %638 = vmatpush1.bf16.msra.mxu0 %v25
  %639 = vmatprep.subr.bf16.mxu0 0
  %640 = vmatpush2.bf16.msra.mxu0 0
  %641 = vmatprep.subr.bf16.mxu0 0
  %642 = vmatpush2.bf16.msra.mxu0 0
  %643 = vmatprep.subr.bf16.mxu0 0
  %644 = vmatpush2.bf16.msra.mxu0 0
  %645 = vmatprep.subr.bf16.mxu0 0
  %646 = vmatpush2.bf16.msra.mxu0 0
  %647 = vmatprep.subr.bf16.mxu0 0
  %648 = vmatpush2.bf16.msra.mxu0 0
  %649 = vmatprep.subr.bf16.mxu0 0
  %650 = vmatpush2.bf16.msra.mxu0 0
  %651 = vmatprep.subr.bf16.mxu0 0
  %652 = vmatpush2.bf16.msra.mxu0 0
  %653 = vmatprep.subr.bf16.mxu0 0
  %654 = vmatpush2.bf16.msra.mxu0 0
  %655 = vmatprep.mubr.bf16.mxu0 0
  %656 = vmatmul.mubr.bf16.gmra.mxu0 %v621
  %v657 = vpop.f32.mrf.mxu0
  %v658 = vadd.f32 %v125, %v657
  %v659 = vpop.f32.mrf.mxu0
  %v660 = vadd.f32 %v126, %v659
  %v661 = vpop.f32.mrf.mxu0
  %v662 = vpop.f32.mrf.mxu0
  %663 = vdwg.mxu0
  %v664 = vxor.u32 %v658, 2147483648
  %v665 = vxor.u32 %v660, 2147483648
  %v666 = vmul.f32 %v664, 1.442695
  %v667 = vpow.pop %v666
  %v668 = vmul.f32 %v665, 1.442695
  %v669 = vpow.pop %v668
  %v670 = vadd.f32 %v667, 1.0
  %v671 = vadd.f32 %v669, 1.0
  %v672 = vrcp.pop %v670
  %v673 = vmul.f32 1.0, %v672
  %v674 = vrcp.pop %v671
  %v675 = vmul.f32 1.0, %v674
  %v676 = vtanh.pop %v660
  %v677 = vmul.f32 %v673, %v612
  %679 = vrot.lane.b32.xlu0 %v676, 64
  %v680 = vpop.permute.xlu0 %679
  %v682 = vmul.f32 %v673, %v680
  %684 = vrot.lane.b32.xlu0 %v682, 64
  %v685 = vpop.permute.xlu0 %684
  %v687 = vadd.f32 %v677, %v685
  %v688 = vtanh.pop %v687
  %690 = vrot.lane.b32.xlu0 %v688, 64
  %v691 = vpop.permute.xlu0 %690
  %v693 = vmul.f32 %v675, %v691
  %v694 = vpack.c.bf16 %v693, %v693
  %v696 = vsel %vm169, %v694, 0
  %698 = vmatprep.subr.bf16.mxu0 0
  %699 = vmatpush1.bf16.msra.mxu0 0
  %700 = vmatprep.subr.bf16.mxu0 0
  %701 = vmatpush1.bf16.msra.mxu0 0
  %702 = vmatprep.subr.bf16.mxu0 0
  %703 = vmatpush1.bf16.msra.mxu0 0
  %704 = vmatprep.subr.bf16.mxu0 0
  %705 = vmatpush1.bf16.msra.mxu0 0
  %706 = vmatprep.subr.bf16.mxu0 %v32
  %707 = vmatpush1.bf16.msra.mxu0 %v31
  %708 = vmatprep.subr.bf16.mxu0 %v30
  %709 = vmatpush1.bf16.msra.mxu0 %v29
  %710 = vmatprep.subr.bf16.mxu0 %v28
  %711 = vmatpush1.bf16.msra.mxu0 %v27
  %712 = vmatprep.subr.bf16.mxu0 %v26
  %713 = vmatpush1.bf16.msra.mxu0 %v25
  %714 = vmatprep.subr.bf16.mxu0 0
  %715 = vmatpush2.bf16.msra.mxu0 0
  %716 = vmatprep.subr.bf16.mxu0 0
  %717 = vmatpush2.bf16.msra.mxu0 0
  %718 = vmatprep.subr.bf16.mxu0 0
  %719 = vmatpush2.bf16.msra.mxu0 0
  %720 = vmatprep.subr.bf16.mxu0 0
  %721 = vmatpush2.bf16.msra.mxu0 0
  %722 = vmatprep.subr.bf16.mxu0 0
  %723 = vmatpush2.bf16.msra.mxu0 0
  %724 = vmatprep.subr.bf16.mxu0 0
  %725 = vmatpush2.bf16.msra.mxu0 0
  %726 = vmatprep.subr.bf16.mxu0 0
  %727 = vmatpush2.bf16.msra.mxu0 0
  %728 = vmatprep.subr.bf16.mxu0 0
  %729 = vmatpush2.bf16.msra.mxu0 0
  %730 = vmatprep.mubr.bf16.mxu0 0
  %731 = vmatmul.mubr.bf16.gmra.mxu0 %v696
  %v732 = vpop.f32.mrf.mxu0
  %v733 = vadd.f32 %v62, %v732
  %v734 = vpop.f32.mrf.mxu0
  %v735 = vadd.f32 %v66, %v734
  %v736 = vpop.f32.mrf.mxu0
  %v737 = vpop.f32.mrf.mxu0
  %738 = vdwg.mxu0
  %v739 = vxor.u32 %v733, 2147483648
  %v740 = vxor.u32 %v735, 2147483648
  %v741 = vmul.f32 %v739, 1.442695
  %v742 = vpow.pop %v741
  %v743 = vmul.f32 %v740, 1.442695
  %v744 = vpow.pop %v743
  %v745 = vadd.f32 %v742, 1.0
  %v746 = vadd.f32 %v744, 1.0
  %v747 = vrcp.pop %v745
  %v748 = vmul.f32 1.0, %v747
  %v749 = vrcp.pop %v746
  %v750 = vmul.f32 1.0, %v749
  %v751 = vtanh.pop %v735
  %v752 = vmul.f32 %v748, %v687
  %754 = vrot.lane.b32.xlu0 %v751, 64
  %v755 = vpop.permute.xlu0 %754
  %v757 = vmul.f32 %v748, %v755
  %759 = vrot.lane.b32.xlu0 %v757, 64
  %v760 = vpop.permute.xlu0 %759
  %v762 = vadd.f32 %v752, %v760
  %v763 = vtanh.pop %v762
  %765 = vrot.lane.b32.xlu0 %v763, 64
  %v766 = vpop.permute.xlu0 %765
  %v768 = vmul.f32 %v750, %v766
  %v769 = vmul.f32 %v768, %v37
  %v770 = vsel %vm169, %v769, 0.0
  %771 = vadd.xlane.f32.xlu0 %v770
  %v772 = vpop.xlane.xlu0 %771
  %v773 = vadd.f32 %v772, %v38
  %vm774 = vcmask 7168
  %775 = vst.msk [vmem:[%s1] sm:$0xff] %vm774, %v773
  // Predicated region
  $region6: #{lstm_drop_forward.1} parent=0 // pred_check
    _
  $region7: #{lstm_drop_forward.1} parent=0 // pred_check_branch
    %777 = sbr.rel (0) target = $region9
  $region8: #{lstm_drop_forward.1} parent=0 // pred_region
    _
  $region9: #{lstm_drop_forward.1} parent=0 // pred_fallthru
    _
  // Predicated region
  $region10: #{lstm_drop_forward.1} parent=0 // pred_check
    _
  $region11: #{lstm_drop_forward.1} parent=0 // pred_check_branch
    %779 = sbr.rel (0) target = $region13
  $region12: #{lstm_drop_forward.1} parent=0 // pred_region
    _
  $region13: #{lstm_drop_forward.1} parent=0 // pred_fallthru
    _

</llo_original>
